<compile_context>
chip_gen: v7x
topology: tpu7x:2x2x1
jax: 0.10.0
libtpu: 0.0.40
codegen_flags: <defaults>
</compile_context>

<pallas_src>
import functools

import jax
import jax.numpy as jnp
from jax.experimental import pallas as pl
from jax.experimental.pallas import tpu as pltpu


def _round_up(x: int, m: int) -> int:
    return ((x + m - 1) // m) * m


# --------------------------------------------------------------------------
# Kernel: batch-tiled, K-tiled linear with f32 accumulator + bias add.
# --------------------------------------------------------------------------
def actor_kernel(x_ref, w_ref, b_ref, loc_ref, acc_ref):
    k = pl.program_id(1)

    @pl.when(k == 0)
    def _():
        acc_ref[...] = jnp.zeros_like(acc_ref)

    # [TB, TK] @ [TK, A_out] on the MXU, f32 accumulation.
    acc_ref[...] += jnp.dot(x_ref[...], w_ref[...],
                            preferred_element_type=jnp.float32)

    @pl.when(k == pl.num_programs(1) - 1)
    def _():
        loc_ref[...] = (acc_ref[...] + b_ref[...]).astype(loc_ref.dtype)


# --------------------------------------------------------------------------
# One-time parameter preparation (call OUTSIDE the per-step forward).
# --------------------------------------------------------------------------
def prepare_actor_params(weight, bias, log_std, *, use_bf16=True):
    """weight: [F, A] (= PyTorch W.T), bias: [A], log_std: [A].

    Returns (weight_prep, bias_prep, log_std). Doing this once avoids a full
    read+write HBM pass over the weight on every actor step.
    """
    F, A = weight.shape
    if A >= 64 and A % 128 != 0:
        # Wide action dim: lane-dense (unmasked vst) output pays off.
        a_out = _round_up(A, 128)
        w = jnp.zeros((F, a_out), weight.dtype).at[:, :A].set(weight)
        b = jnp.zeros((1, a_out), jnp.float32).at[:, :A].set(
            bias.astype(jnp.float32)[None, :])
    else:
        # Tiny (or already lane-aligned) action dim: masked stores are far
        # cheaper than 16x-inflated writeback + a slice copy.
        w = weight
        b = bias.astype(jnp.float32)[None, :]
    if use_bf16:
        w = w.astype(jnp.bfloat16)  # halves weight DMA bytes on v5e/v6e/v7x
    return w, b, log_std


# --------------------------------------------------------------------------
# Tiling heuristics.
# --------------------------------------------------------------------------
def _select_tk(F: int) -> int:
    """K (feature) tile: full F for moderate sizes, else a 128-multiple that
    divides F (avoids garbage in partial-K accumulation)."""
    max_tk = 2048
    if F <= max_tk:
        return F
    for tk in range(max_tk, 127, -128):
        if F % tk == 0:
            return tk
    return F  # no clean divisor: correctness over tiling


def _select_tb(B, TK, A_out, x_itemsize, out_itemsize, w_itemsize, block_b):
    """Batch tile: fits a v7x-safe VMEM budget and gives >=2 tiles when B allows."""
    budget = 48 * 1024 * 1024                      # below v7x's 64 MiB/TC
    fixed = 2 * TK * A_out * w_itemsize + 2 * A_out * 4
    per_row = 2 * TK * x_itemsize + 2 * A_out * out_itemsize + A_out * 4
    tb_cap = max(8, (budget - fixed) // max(per_row, 1))
    tb_two = _round_up(pl.cdiv(B, 2), 8)           # >=2 batch tiles for megacore
    tb = min(block_b, tb_two, _round_up(B, 8), int(tb_cap))
    tb = max(8, (tb // 8) * 8)
    vmem_est = fixed + per_row * tb
    return tb, vmem_est


# --------------------------------------------------------------------------
# Forward.
# --------------------------------------------------------------------------
@functools.partial(jax.jit, static_argnames=("block_b", "out_dtype"))
def actor_forward(features, weight_p, bias_p, log_std, *, block_b=512,
                  out_dtype=None):
    """features: [B, F]; weight_p/bias_p from prepare_actor_params; log_std: [A]."""
    B, F = features.shape
    A_out = weight_p.shape[1]
    A = log_std.shape[0]
    out_dtype = out_dtype if out_dtype is not None else features.dtype

    # Match input dtype to the prepared weight (bf16 inputs on all generations
    # when enabled in prepare_actor_params; f32 MXU accumulation regardless).
    x = features
    if weight_p.dtype == jnp.bfloat16:
        x = x.astype(jnp.bfloat16)

    TK = _select_tk(F)
    TB, vmem_est = _select_tb(
        B, TK, A_out,
        x_itemsize=jnp.dtype(x.dtype).itemsize,
        out_itemsize=jnp.dtype(out_dtype).itemsize,
        w_itemsize=jnp.dtype(weight_p.dtype).itemsize,
        block_b=block_b,
    )
    grid = (pl.cdiv(B, TB), pl.cdiv(F, TK))
    vmem_limit = int(min(64 * 1024 * 1024, max(2 * vmem_est, 16 * 1024 * 1024)))

    bytes_accessed = (B * F * jnp.dtype(x.dtype).itemsize
                      + F * A_out * jnp.dtype(weight_p.dtype).itemsize
                      + A_out * 4
                      + B * A_out * jnp.dtype(out_dtype).itemsize)

    loc_full = pl.pallas_call(
        actor_kernel,
        out_shape=jax.ShapeDtypeStruct((B, A_out), out_dtype),
        grid=grid,
        in_specs=[
            pl.BlockSpec((TB, TK), lambda i, k: (i, k)),      # x tile, pipelined
            pl.BlockSpec((TK, A_out), lambda i, k: (k, 0)),   # weight K-slab
            pl.BlockSpec((1, A_out), lambda i, k: (0, 0)),    # bias, VMEM-resident
        ],
        out_specs=pl.BlockSpec((TB, A_out), lambda i, k: (i, 0)),
        scratch_shapes=[pltpu.VMEM((TB, A_out), jnp.float32)],  # f32 accumulator
        compiler_params=pltpu.CompilerParams(
            dimension_semantics=("parallel", "arbitrary"),     # megacore on v7x
            vmem_limit_bytes=vmem_limit,
        ),
        cost_estimate=pl.CostEstimate(
            flops=2 * B * F * A_out,
            transcendentals=0,
            bytes_accessed=int(bytes_accessed),
        ),
    )(x, weight_p, bias_p)

    loc = loc_full if A_out == A else loc_full[:, :A]
    # scale has no data dependence on features -> computed outside the kernel.
    scale = jnp.broadcast_to(jnp.exp(log_std).astype(out_dtype)[None, :], (B, A))
    return loc, scale


# --------------------------------------------------------------------------
# Self-test.
# --------------------------------------------------------------------------
if __name__ == "__main__":
    # Small shapes implied by the module: batch=8, feature_dim=32, action_dim=8.
    B, F, A = 8, 32, 8
    key = jax.random.PRNGKey(0)
    k_x, k_w, k_b = jax.random.split(key, 3)

    features = jax.random.normal(k_x, (B, F), dtype=jnp.float32)
    # Deterministic synthetic parameters (stand-in for LazyLinear init).
    weight = jax.random.normal(k_w, (F, A), dtype=jnp.float32) * (1.0 / jnp.sqrt(F))
    bias = jax.random.normal(k_b, (A,), dtype=jnp.float32) * 0.01
    log_std = jnp.zeros((A,), dtype=jnp.float32)  # nn.Parameter(torch.zeros(action_dim))

    loc_ref = features @ weight + bias[None, :]
    scale_ref = jnp.broadcast_to(jnp.exp(log_std)[None, :], (B, A))

    # --- f32 path (tight tolerance against the reference) ---
    w32, b32, ls = prepare_actor_params(weight, bias, log_std, use_bf16=False)
    loc, scale = actor_forward(features, w32, b32, ls)
    jax.block_until_ready((loc, scale))
    assert loc.shape == (B, A) and scale.shape == (B, A)
    assert jnp.allclose(loc, loc_ref, atol=1e-5, rtol=1e-5)
    assert jnp.allclose(scale, scale_ref, atol=1e-6, rtol=1e-6)

    # --- default bf16-input path (halves input-side HBM bytes; looser tol) ---
    wbf, bbf, _ = prepare_actor_params(weight, bias, log_std, use_bf16=True)
    loc_bf, scale_bf = actor_forward(features, wbf, bbf, ls)
    jax.block_until_ready((loc_bf, scale_bf))
    assert jnp.allclose(loc_bf, loc_ref, atol=2e-2, rtol=2e-2)
    assert jnp.allclose(scale_bf, scale_ref, atol=1e-6, rtol=1e-6)

    # --- larger batch: multi-tile grid, partial last tile (200 = 3*64 + 8) ---
    B2 = 200
    feats2 = jax.random.normal(jax.random.PRNGKey(1), (B2, F), dtype=jnp.float32)
    loc2, scale2 = actor_forward(feats2, w32, b32, ls, block_b=64)
    jax.block_until_ready((loc2, scale2))
    assert jnp.allclose(loc2, feats2 @ weight + bias[None, :], atol=1e-5, rtol=1e-5)
    assert jnp.allclose(scale2,
                        jnp.broadcast_to(jnp.exp(log_std)[None, :], (B2, A)),
                        atol=1e-6, rtol=1e-6)

    print("KERNEL_OK")
</pallas_src>

<mosaic_0001>
module attributes {stable_mosaic.version = 11 : i64} {
  func.func @actor_kernel(%arg0: i32, %arg1: i32, %arg2: memref<8x32xf32, #tpu.memory_space<vmem>>, %arg3: memref<32x8xf32, #tpu.memory_space<vmem>>, %arg4: memref<1x8xf32, #tpu.memory_space<vmem>>, %arg5: memref<8x8xf32, #tpu.memory_space<vmem>>, %arg6: memref<8x8xf32, #tpu.memory_space<vmem>>) attributes {dimension_semantics = [#tpu.dimension_semantics<parallel>, #tpu.dimension_semantics<arbitrary>], iteration_bounds = array<i64: 1, 1>, scalar_prefetch = 0 : i64, scratch_operands = 1 : i64, tpu.core_type = #tpu.core_type<tc>, window_params = [{transform_indices = @transform_0, window_bounds = array<i64: 8, 32>}, {transform_indices = @transform_1, window_bounds = array<i64: 32, 8>}, {pipeline_mode = #tpu.pipeline_mode<synchronous>, transform_indices = @transform_2, window_bounds = array<i64: 1, 8>}, {transform_indices = @transform_3, window_bounds = array<i64: 8, 8>}]} {
    %c0_i32 = arith.constant 0 : i32
    %0 = arith.cmpi eq, %arg1, %c0_i32 : i32
    %1 = arith.extui %0 : i1 to i32
    %c0_i32_0 = arith.constant 0 : i32
    %2 = arith.cmpi ne, %1, %c0_i32_0 : i32
    scf.if %2 {
      %cst_10 = arith.constant 0.000000e+00 : f32
      %12 = vector.broadcast %cst_10 : f32 to vector<8x8xf32>
      %c0_11 = arith.constant 0 : index
      %c0_12 = arith.constant 0 : index
      %13 = vector.load %arg6[%c0_11, %c0_12] : memref<8x8xf32, #tpu.memory_space<vmem>>, vector<8x8xf32>
      tpu.vector_store %arg6[%c0_11, %c0_12], %12 {strides = array<i32>} : memref<8x8xf32, #tpu.memory_space<vmem>>, vector<8x8xf32>,
    } else {
    }
    %c0 = arith.constant 0 : index
    %c0_1 = arith.constant 0 : index
    %3 = vector.load %arg6[%c0, %c0_1] : memref<8x8xf32, #tpu.memory_space<vmem>>, vector<8x8xf32>
    %c0_2 = arith.constant 0 : index
    %c0_3 = arith.constant 0 : index
    %4 = vector.load %arg2[%c0_2, %c0_3] : memref<8x32xf32, #tpu.memory_space<vmem>>, vector<8x32xf32>
    %c0_4 = arith.constant 0 : index
    %c0_5 = arith.constant 0 : index
    %5 = vector.load %arg3[%c0_4, %c0_5] : memref<32x8xf32, #tpu.memory_space<vmem>>, vector<32x8xf32>
    %cst = arith.constant dense<0.000000e+00> : vector<8x8xf32>
    %6 = tpu.matmul %4, %5, %cst {dimension_numbers = #tpu.dot_dimension_numbers<[1], [0], [0], [1], [0, 0, 1, 1], [], []>} : vector<8x32xf32>, vector<32x8xf32>, vector<8x8xf32> -> vector<8x8xf32>
    %7 = arith.addf %3, %6 : vector<8x8xf32>
    %c0_6 = arith.constant 0 : index
    %c0_7 = arith.constant 0 : index
    %8 = vector.load %arg6[%c0_6, %c0_7] : memref<8x8xf32, #tpu.memory_space<vmem>>, vector<8x8xf32>
    tpu.vector_store %arg6[%c0_6, %c0_7], %7 {strides = array<i32>} : memref<8x8xf32, #tpu.memory_space<vmem>>, vector<8x8xf32>,
    %c0_i32_8 = arith.constant 0 : i32
    %9 = arith.cmpi eq, %arg1, %c0_i32_8 : i32
    %10 = arith.extui %9 : i1 to i32
    %c0_i32_9 = arith.constant 0 : i32
    %11 = arith.cmpi ne, %10, %c0_i32_9 : i32
    scf.if %11 {
      %c0_10 = arith.constant 0 : index
      %c0_11 = arith.constant 0 : index
      %12 = vector.load %arg6[%c0_10, %c0_11] : memref<8x8xf32, #tpu.memory_space<vmem>>, vector<8x8xf32>
      %c0_12 = arith.constant 0 : index
      %c0_13 = arith.constant 0 : index
      %13 = vector.load %arg4[%c0_12, %c0_13] : memref<1x8xf32, #tpu.memory_space<vmem>>, vector<1x8xf32>
      %14 = vector.broadcast %13 : vector<1x8xf32> to vector<8x8xf32>
      %15 = arith.addf %12, %14 : vector<8x8xf32>
      %c0_14 = arith.constant 0 : index
      %c0_15 = arith.constant 0 : index
      %16 = vector.load %arg5[%c0_14, %c0_15] : memref<8x8xf32, #tpu.memory_space<vmem>>, vector<8x8xf32>
      tpu.vector_store %arg5[%c0_14, %c0_15], %15 {strides = array<i32>} : memref<8x8xf32, #tpu.memory_space<vmem>>, vector<8x8xf32>,
    } else {
    }
    return
  }
  func.func @transform_0(%arg0: i32, %arg1: i32) -> (i32, i32) {
    %c0_i32 = arith.constant 0 : i32
    return %arg0, %arg1 : i32, i32
  }
  func.func @transform_1(%arg0: i32, %arg1: i32) -> (i32, i32) {
    %c0_i32 = arith.constant 0 : i32
    %c0_i32_0 = arith.constant 0 : i32
    return %arg1, %c0_i32 : i32, i32
  }
  func.func @transform_2(%arg0: i32, %arg1: i32) -> (i32, i32) {
    %c0_i32 = arith.constant 0 : i32
    %c0_i32_0 = arith.constant 0 : i32
    %c0_i32_1 = arith.constant 0 : i32
    return %c0_i32, %c0_i32_0 : i32, i32
  }
  func.func @transform_3(%arg0: i32, %arg1: i32) -> (i32, i32) {
    %c0_i32 = arith.constant 0 : i32
    %c0_i32_0 = arith.constant 0 : i32
    return %arg0, %c0_i32 : i32, i32
  }
}

</mosaic_0001>

<llo_original>
// kernel: actor_forward.1
$region0: #{actor_forward.1}
  #allocation0 [shape = 'u32[]', space=smem, size = 0x4, offset = 0x4, fixed_abs, tag = 'smem constant byte address 0x4 - core index']
  #allocation1 [shape = 'u32[144,128]{1,0:T(1,128)}', space=vmem, size = 0x12000, scoped, tag = 'internal scratch']
  #allocation2 [shape = 'f32[8,8]{1,0:T(8,128)}', space=vmem, size = 0x1000, scoped, tag = 'scratch operand']
  %s0 = inlined_call_operand.vmem [shape: f32[8,32], index: 0, kind: input, shape index: {}]
  %s1 = inlined_call_operand.vmem [shape: f32[32,8], index: 1, kind: input, shape index: {}]
  %s2 = inlined_call_operand.vmem [shape: f32[1,8], index: 2, kind: input, shape index: {}]
  %s3 = inlined_call_operand.hbm [shape: f32[8,8], index: 3, kind: output, shape index: {}]
  %s4 = sld [smem:[#allocation0]]
  $region30: #{actor_forward.1} parent=0
    _
  %s6 = ssub.s32 1, %s4
  %s7 = scalar_select 0, %s6, %s4
  $region1: #{actor_forward.1} parent=0
    #allocation3 [shape = 'u8[4096]{0}', space=vmem, size = 0x1000, scoped, tag = 'output window, operand 0, single buffered']
    #allocation4 [shape = 's32[1]{0}', space=sflag, size = 0x4, scoped, tag = 'scoped memory for actor_forward.1']
    %8 = vsyncpa [#allocation4], 0
    // Predicated region
    $region2: #{actor_forward.1} parent=1 // pred_check
      _
    $region3: #{actor_forward.1} parent=1 // pred_check_branch
      %10 = sbr.rel (0) target = $region5
    $region4: #{actor_forward.1} parent=1 // pred_region
      _
    $region5: #{actor_forward.1} parent=1 // pred_fallthru
      _
    // Predicated region
    $region6: #{actor_forward.1} parent=1 // pred_check
      _
    $region7: #{actor_forward.1} parent=1 // pred_check_branch
      %12 = sbr.rel (0) target = $region9
    $region8: #{actor_forward.1} parent=1 // pred_region
      _
    $region9: #{actor_forward.1} parent=1 // pred_fallthru
      _
    // Predicated region
    $region10: #{actor_forward.1} parent=1 // pred_check
      _
    $region11: #{actor_forward.1} parent=1 // pred_check_branch
      %14 = sbr.rel (0) target = $region13
    $region12: #{actor_forward.1} parent=1 // pred_region
      _
    $region13: #{actor_forward.1} parent=1 // pred_fallthru
      _
    %p15 = scmp.eq.s32.totalorder 0, 0
    // Predicated region
    $region14: #{actor_forward.1} parent=1 // pred_check
      %p16 = pneg %p15
    $region15: #{actor_forward.1} parent=1 // pred_check_branch
      %18 = sbr.rel (%p16) target = $region17
    $region16: #{actor_forward.1} parent=1 // pred_region
      %vm19 = vcmask 64512
      %20 = vst.msk [vmem:[#allocation2] sm:$0xff] %vm19, 0.0
    $region17: #{actor_forward.1} parent=1 // pred_fallthru
      _
    %v21 = vld [vmem:[#allocation2] sm:$0xff]
    %v22 = vld [vmem:[%s0] sm:$0xff]
    %v23 = vld [vmem:[%s1] sm:$0xff]
    %v24 = vld [vmem:[%s1 + $0x8] sm:$0xff]
    %v25 = vld [vmem:[%s1 + $0x10] sm:$0xff]
    %v26 = vld [vmem:[%s1 + $0x18] sm:$0xff]
    %vm27 = vcmask 261120
    %v29 = vsel %vm27, %v22, 0
    %31 = vmatprep.subr.mxu0 0.0
    %32 = vmatpush1.msra.mxu0 %v23
    %33 = vmatprep.subr.mxu0 0.0
    %34 = vmatpush1.msra.mxu0 %v24
    %35 = vmatprep.subr.mxu0 0.0
    %36 = vmatpush1.msra.mxu0 %v25
    %37 = vmatprep.subr.mxu0 0.0
    %38 = vmatpush1.msra.mxu0 %v26
    %39 = vmatprep.subr.mxu0 0.0
    %40 = vmatpush1.msra.mxu0 0.0
    %41 = vmatprep.subr.mxu0 0.0
    %42 = vmatpush1.msra.mxu0 0.0
    %43 = vmatprep.subr.mxu0 0.0
    %44 = vmatpush1.msra.mxu0 0.0
    %45 = vmatprep.subr.mxu0 0.0
    %46 = vmatpush1.msra.mxu0 0.0
    %47 = vmatprep.subr.mxu0 0.0
    %48 = vmatpush1.msra.mxu0 0.0
    %49 = vmatprep.subr.mxu0 0.0
    %50 = vmatpush1.msra.mxu0 0.0
    %51 = vmatprep.subr.mxu0 0.0
    %52 = vmatpush1.msra.mxu0 0.0
    %53 = vmatprep.subr.mxu0 0.0
    %54 = vmatpush1.msra.mxu0 0.0
    %55 = vmatprep.subr.mxu0 0.0
    %56 = vmatpush1.msra.mxu0 0.0
    %57 = vmatprep.subr.mxu0 0.0
    %58 = vmatpush1.msra.mxu0 0.0
    %59 = vmatprep.subr.mxu0 0.0
    %60 = vmatpush1.msra.mxu0 0.0
    %61 = vmatprep.subr.mxu0 0.0
    %62 = vmatpush1.msra.mxu0 0.0
    %63 = vmatprep.subr.mxu0 0.0
    %64 = vmatpush1.msra.mxu0 0.0
    %65 = vmatprep.subr.mxu0 0.0
    %66 = vmatpush1.msra.mxu0 0.0
    %67 = vmatprep.subr.mxu0 0.0
    %68 = vmatpush1.msra.mxu0 0.0
    %69 = vmatprep.subr.mxu0 0.0
    %70 = vmatpush1.msra.mxu0 0.0
    %71 = vmatprep.subr.mxu0 0.0
    %72 = vmatpush1.msra.mxu0 0.0
    %73 = vmatprep.subr.mxu0 0.0
    %74 = vmatpush1.msra.mxu0 0.0
    %75 = vmatprep.subr.mxu0 0.0
    %76 = vmatpush1.msra.mxu0 0.0
    %77 = vmatprep.subr.mxu0 0.0
    %78 = vmatpush1.msra.mxu0 0.0
    %79 = vmatprep.subr.mxu0 0.0
    %80 = vmatpush1.msra.mxu0 0.0
    %81 = vmatprep.subr.mxu0 0.0
    %82 = vmatpush1.msra.mxu0 0.0
    %83 = vmatprep.subr.mxu0 0.0
    %84 = vmatpush1.msra.mxu0 0.0
    %85 = vmatprep.subr.mxu0 0.0
    %86 = vmatpush1.msra.mxu0 0.0
    %87 = vmatprep.subr.mxu0 0.0
    %88 = vmatpush1.msra.mxu0 0.0
    %89 = vmatprep.subr.mxu0 0.0
    %90 = vmatpush1.msra.mxu0 0.0
    %91 = vmatprep.subr.mxu0 0.0
    %92 = vmatpush1.msra.mxu0 0.0
    %93 = vmatprep.subr.mxu0 0.0
    %94 = vmatpush1.msra.mxu0 0.0
    %95 = vmatprep.mubr.f32.mxu0 0.0
    %96 = vmatmul.mubr.f32.gmra.mrb[0].mxu0 %v29
    %v97 = vpop.f32.mrb[0].mxu0
    %v98 = vadd.f32 0.0, %v97
    %v99 = vpop.f32.mrb[0].mxu0
    %100 = vdwg.mxu0
    %v101 = vadd.f32 %v21, %v98
    %vm102 = vcmask 64512
    %103 = vst.msk [vmem:[#allocation2] sm:$0xff] %vm102, %v101
    // Predicated region
    $region18: #{actor_forward.1} parent=1 // pred_check
      %p104 = pneg %p15
    $region19: #{actor_forward.1} parent=1 // pred_check_branch
      %106 = sbr.rel (%p104) target = $region21
    $region20: #{actor_forward.1} parent=1 // pred_region
      %v107 = vld [vmem:[#allocation2] sm:$0xff]
      %v108 = vld [vmem:[%s2] sm:$0x1]
      %v110 = vlaneseq
      %v111 = vshrl.u32 %v110, 7
      %v112 = vsub.s32 0, %v111
      %v113 = vrot.slane %v108, %v112
      %v115 = vadd.f32 %v107, %v113
      %116 = vst.msk [vmem:[#allocation3] sm:$0xff] %vm102, %v115
    $region21: #{actor_forward.1} parent=1 // pred_fallthru
      _
    // Predicated region
    $region22: #{actor_forward.1} parent=1 // pred_check
      _
    $region23: #{actor_forward.1} parent=1 // pred_check_branch
      %118 = sbr.rel (0) target = $region25
    $region24: #{actor_forward.1} parent=1 // pred_region
      %s120 = ssub.s32 128, 128
      %121 = vsyncadd [#allocation4], %s120
      %s123 = sshll.u32 [#allocation3], 4
      %s124 = int_to_ptr.vmem [resolvable:$true] %s123
      %126 = dma.vmem_to_hbm [thread:$0]  %s124, 128, %s3, [#allocation4]
    $region25: #{actor_forward.1} parent=1 // pred_fallthru
      _
    // Predicated region
    $region26: #{actor_forward.1} parent=1 // pred_check
      _
    $region27: #{actor_forward.1} parent=1 // pred_check_branch
      %128 = sbr.rel (0) target = $region29
    $region28: #{actor_forward.1} parent=1 // pred_region
      %129 = dma.done [#allocation4], 128
    $region29: #{actor_forward.1} parent=1 // pred_fallthru
      _
    %130 = vsyncpa [#allocation4], 1

</llo_original>
